<compile_context>
chip_gen: v7x
topology: tpu7x:2x2x1
jax: 0.10.0
libtpu: 0.0.40
codegen_flags: <defaults>
</compile_context>

<pallas_src>
import jax
import jax.numpy as jnp
from jax.experimental import pallas as pl
from jax.experimental.pallas import tpu as pltpu


def _round_up(x, m):
    return ((x + m - 1) // m) * m


def _linear_kernel(x_ref, w_ref, b_ref, o_ref, acc_ref):
    """One (tm, tn) output tile, reduced over the K grid axis.

    x tile: [tm, tk]; w tile (weight pre-transposed to [K, N]): [tk, tn].
    """
    k = pl.program_id(2)

    @pl.when(k == 0)
    def _():
        acc_ref[...] = jnp.zeros_like(acc_ref)

    acc_ref[...] += jnp.dot(
        x_ref[...], w_ref[...], preferred_element_type=jnp.float32
    )

    @pl.when(k == pl.num_programs(2) - 1)
    def _():
        o_ref[...] = (
            acc_ref[...] + b_ref[...].astype(jnp.float32)
        ).astype(o_ref.dtype)


def _choose_tiles(M, N, K):
    """Adaptive tiles: big enough to feed the 256-wide MXU, small enough to
    fit double-buffered in VMEM on every generation (v5e/v6e 128 MiB,
    v7x 64 MiB)."""
    # Row tile: multiples of 256 match the v6e/v7x MXU; multiple of 16 keeps
    # bf16 sublane packing clean for small problems.
    if M >= 512:
        tm = 512
    elif M >= 256:
        tm = 256
    else:
        tm = _round_up(max(M, 1), 16)

    # Output-column tile: large multiple of 128 -> unmasked lane-dense stores.
    tn = min(512, _round_up(N, 128))
    # Reduction tile: big K chunks amortize per-step overhead & DMA cost.
    tk = min(1024, _round_up(K, 128))

    M_pad = _round_up(M, tm)
    N_pad = _round_up(N, tn)
    K_pad = _round_up(K, tk)

    # v7x has 2 TensorCores: for non-trivial problems whose parallel grid
    # collapsed to a single block, split the output columns so both cores
    # get work.  Tiny problems stay single-block (no pipeline overhead).
    if (M_pad // tm) * (N_pad // tn) == 1 and M >= 256 and N >= 256:
        tn = max(128, tn // 2)
        N_pad = _round_up(N, tn)

    return tm, tn, tk, M_pad, N_pad, K_pad


@jax.jit
def on_demand_linear(x, weight, bias=None):
    """y = x @ weight.T + bias  (mode='pre': bf16 params, f32 accumulation)."""
    *lead, K = x.shape
    N, K_w = weight.shape
    assert K == K_w, (K, K_w)

    x2d = x.reshape(-1, K)
    M = x2d.shape[0]

    if bias is None:
        bias = jnp.zeros((N,), dtype=weight.dtype)

    tm, tn, tk, M_pad, N_pad, K_pad = _choose_tiles(M, N, K)

    # One-time layout change: weight [N, K] -> [K, N].  Removes the per-step
    # XLU transpose inside the kernel and gives a lane-dense layout along the
    # output-feature dim for both the DMA and the MXU feed.
    w_t = weight.T

    # Pad to tile multiples (zero K-padding contributes 0 to the dot, padded
    # M/N rows & cols are sliced off afterwards).
    if (M_pad, K_pad) != (M, K):
        x2d = jnp.pad(x2d, ((0, M_pad - M), (0, K_pad - K)))
    if (K_pad, N_pad) != (K, N):
        w_t = jnp.pad(w_t, ((0, K_pad - K), (0, N_pad - N)))
    bias2d = bias.reshape(1, N)
    if N_pad != N:
        bias2d = jnp.pad(bias2d, ((0, 0), (0, N_pad - N)))

    grid = (M_pad // tm, N_pad // tn, K_pad // tk)

    # VMEM working set: double-buffered inputs + double-buffered out tile +
    # f32 accumulator scratch + bias tile.  Give the compiler explicit (but
    # v7x-safe) headroom.
    itemsize = jnp.dtype(x.dtype).itemsize
    working_set = (
        2 * itemsize * (tm * tk + tk * tn)   # x & w tiles, double-buffered
        + 2 * itemsize * tm * tn             # out tile, double-buffered
        + 4 * tm * tn                        # f32 accumulator scratch
        + 2 * itemsize * tn                  # bias tile
    )
    vmem_limit = int(min(max(32 * 1024 * 1024, 2 * working_set),
                         96 * 1024 * 1024))

    cost = pl.CostEstimate(
        flops=2 * M_pad * N_pad * K_pad,
        bytes_accessed=itemsize
        * (M_pad * K_pad + K_pad * N_pad + M_pad * N_pad + N_pad),
        transcendentals=0,
    )

    out = pl.pallas_call(
        _linear_kernel,
        out_shape=jax.ShapeDtypeStruct((M_pad, N_pad), x.dtype),
        grid_spec=pltpu.PrefetchScalarGridSpec(
            num_scalar_prefetch=0,
            grid=grid,
            in_specs=[
                pl.BlockSpec((tm, tk), lambda i, j, k: (i, k)),   # x
                pl.BlockSpec((tk, tn), lambda i, j, k: (k, j)),   # weight.T
                pl.BlockSpec((1, tn), lambda i, j, k: (0, j)),    # bias
            ],
            out_specs=pl.BlockSpec((tm, tn), lambda i, j, k: (i, j)),
            scratch_shapes=[pltpu.VMEM((tm, tn), jnp.float32)],
        ),
        compiler_params=pltpu.CompilerParams(
            dimension_semantics=("parallel", "parallel", "arbitrary"),
            vmem_limit_bytes=vmem_limit,
        ),
        cost_estimate=cost,
    )(x2d, w_t, bias2d)

    out = out[:M, :N]
    return out.reshape(*lead, N)


if __name__ == "__main__":
    # Small shapes consistent with nn.Linear(in_features=128, out_features=256)
    batch, seq, in_features, out_features = 2, 8, 128, 256

    key = jax.random.PRNGKey(0)
    kx, kw, kb = jax.random.split(key, 3)

    x = jax.random.normal(kx, (batch, seq, in_features), dtype=jnp.float32)
    weight = (
        jax.random.normal(kw, (out_features, in_features), dtype=jnp.float32) * 0.02
    )
    bias = jax.random.normal(kb, (out_features,), dtype=jnp.float32) * 0.02

    # mode='pre' casts the linear (and therefore the matmul inputs) to bf16.
    x_bf16 = x.astype(jnp.bfloat16)
    w_bf16 = weight.astype(jnp.bfloat16)
    b_bf16 = bias.astype(jnp.bfloat16)

    y = on_demand_linear(x_bf16, w_bf16, b_bf16)
    y = jax.block_until_ready(y)

    # Sanity-check against a plain-JAX reference.
    ref = (
        jnp.dot(
            x_bf16.reshape(-1, in_features),
            w_bf16.T,
            preferred_element_type=jnp.float32,
        )
        + b_bf16.astype(jnp.float32)
    ).astype(jnp.bfloat16).reshape(batch, seq, out_features)

    assert y.shape == (batch, seq, out_features)
    assert y.dtype == jnp.bfloat16
    assert jnp.allclose(
        y.astype(jnp.float32), ref.astype(jnp.float32), atol=1e-2, rtol=1e-2
    )

    print("KERNEL_OK")
</pallas_src>

<mosaic_0001>
module attributes {stable_mosaic.version = 11 : i64} {
  func.func @_linear_kernel(%arg0: i32, %arg1: i32, %arg2: i32, %arg3: memref<16x128xbf16, #tpu.memory_space<vmem>>, %arg4: memref<128x256xbf16, #tpu.memory_space<vmem>>, %arg5: memref<1x256xbf16, #tpu.memory_space<vmem>>, %arg6: memref<16x256xbf16, #tpu.memory_space<vmem>>, %arg7: memref<16x256xf32, #tpu.memory_space<vmem>>) attributes {dimension_semantics = [#tpu.dimension_semantics<parallel>, #tpu.dimension_semantics<parallel>, #tpu.dimension_semantics<arbitrary>], iteration_bounds = array<i64: 1, 1, 1>, scalar_prefetch = 0 : i64, scratch_operands = 1 : i64, tpu.core_type = #tpu.core_type<tc>, window_params = [{transform_indices = @transform_0, window_bounds = array<i64: 16, 128>}, {transform_indices = @transform_1, window_bounds = array<i64: 128, 256>}, {transform_indices = @transform_2, window_bounds = array<i64: 1, 256>}, {transform_indices = @transform_3, window_bounds = array<i64: 16, 256>}]} {
    %c0_i32 = arith.constant 0 : i32
    %0 = arith.cmpi eq, %arg2, %c0_i32 : i32
    %1 = arith.extui %0 : i1 to i32
    %c0_i32_0 = arith.constant 0 : i32
    %2 = arith.cmpi ne, %1, %c0_i32_0 : i32
    scf.if %2 {
      %cst_10 = arith.constant 0.000000e+00 : f32
      %12 = vector.broadcast %cst_10 : f32 to vector<16x256xf32>
      %c0_11 = arith.constant 0 : index
      %c0_12 = arith.constant 0 : index
      %13 = vector.load %arg7[%c0_11, %c0_12] : memref<16x256xf32, #tpu.memory_space<vmem>>, vector<16x256xf32>
      tpu.vector_store %arg7[%c0_11, %c0_12], %12 {strides = array<i32>} : memref<16x256xf32, #tpu.memory_space<vmem>>, vector<16x256xf32>,
    } else {
    }
    %c0 = arith.constant 0 : index
    %c0_1 = arith.constant 0 : index
    %3 = vector.load %arg7[%c0, %c0_1] : memref<16x256xf32, #tpu.memory_space<vmem>>, vector<16x256xf32>
    %c0_2 = arith.constant 0 : index
    %c0_3 = arith.constant 0 : index
    %4 = vector.load %arg3[%c0_2, %c0_3] : memref<16x128xbf16, #tpu.memory_space<vmem>>, vector<16x128xbf16>
    %c0_4 = arith.constant 0 : index
    %c0_5 = arith.constant 0 : index
    %5 = vector.load %arg4[%c0_4, %c0_5] : memref<128x256xbf16, #tpu.memory_space<vmem>>, vector<128x256xbf16>
    %cst = arith.constant dense<0.000000e+00> : vector<16x256xf32>
    %6 = tpu.matmul %4, %5, %cst {dimension_numbers = #tpu.dot_dimension_numbers<[1], [0], [0], [1], [0, 0, 1, 1], [], []>} : vector<16x128xbf16>, vector<128x256xbf16>, vector<16x256xf32> -> vector<16x256xf32>
    %7 = arith.addf %3, %6 : vector<16x256xf32>
    %c0_6 = arith.constant 0 : index
    %c0_7 = arith.constant 0 : index
    %8 = vector.load %arg7[%c0_6, %c0_7] : memref<16x256xf32, #tpu.memory_space<vmem>>, vector<16x256xf32>
    tpu.vector_store %arg7[%c0_6, %c0_7], %7 {strides = array<i32>} : memref<16x256xf32, #tpu.memory_space<vmem>>, vector<16x256xf32>,
    %c0_i32_8 = arith.constant 0 : i32
    %9 = arith.cmpi eq, %arg2, %c0_i32_8 : i32
    %10 = arith.extui %9 : i1 to i32
    %c0_i32_9 = arith.constant 0 : i32
    %11 = arith.cmpi ne, %10, %c0_i32_9 : i32
    scf.if %11 {
      %c0_10 = arith.constant 0 : index
      %c0_11 = arith.constant 0 : index
      %12 = vector.load %arg7[%c0_10, %c0_11] : memref<16x256xf32, #tpu.memory_space<vmem>>, vector<16x256xf32>
      %c0_12 = arith.constant 0 : index
      %c0_13 = arith.constant 0 : index
      %13 = vector.load %arg5[%c0_12, %c0_13] : memref<1x256xbf16, #tpu.memory_space<vmem>>, vector<1x256xbf16>
      %14 = arith.extf %13 : vector<1x256xbf16> to vector<1x256xf32>
      %15 = vector.broadcast %14 : vector<1x256xf32> to vector<16x256xf32>
      %16 = arith.addf %12, %15 : vector<16x256xf32>
      %17 = arith.truncf %16 : vector<16x256xf32> to vector<16x256xbf16>
      %c0_14 = arith.constant 0 : index
      %c0_15 = arith.constant 0 : index
      %18 = vector.load %arg6[%c0_14, %c0_15] : memref<16x256xbf16, #tpu.memory_space<vmem>>, vector<16x256xbf16>
      tpu.vector_store %arg6[%c0_14, %c0_15], %17 {strides = array<i32>} : memref<16x256xbf16, #tpu.memory_space<vmem>>, vector<16x256xbf16>,
    } else {
    }
    return
  }
  func.func @transform_0(%arg0: i32, %arg1: i32, %arg2: i32) -> (i32, i32) {
    %c0_i32 = arith.constant 0 : i32
    return %arg0, %arg2 : i32, i32
  }
  func.func @transform_1(%arg0: i32, %arg1: i32, %arg2: i32) -> (i32, i32) {
    %c0_i32 = arith.constant 0 : i32
    return %arg2, %arg1 : i32, i32
  }
  func.func @transform_2(%arg0: i32, %arg1: i32, %arg2: i32) -> (i32, i32) {
    %c0_i32 = arith.constant 0 : i32
    %c0_i32_0 = arith.constant 0 : i32
    return %c0_i32, %arg1 : i32, i32
  }
  func.func @transform_3(%arg0: i32, %arg1: i32, %arg2: i32) -> (i32, i32) {
    %c0_i32 = arith.constant 0 : i32
    return %arg0, %arg1 : i32, i32
  }
}

</mosaic_0001>

<llo_original>
// kernel: on_demand_linear.1
$region0: #{on_demand_linear.1}
  #allocation0 [shape = 'u32[]', space=smem, size = 0x4, offset = 0x4, fixed_abs, tag = 'smem constant byte address 0x4 - core index']
  #allocation1 [shape = 'u32[144,128]{1,0:T(1,128)}', space=vmem, size = 0x12000, scoped, tag = 'internal scratch']
  #allocation2 [shape = 'f32[16,256]{1,0:T(8,128)}', space=vmem, size = 0x4000, scoped, tag = 'scratch operand']
  %s0 = inlined_call_operand.vmem [shape: bf16[16,128], index: 0, kind: input, shape index: {}]
  %s1 = inlined_call_operand.vmem [shape: bf16[128,256], index: 1, kind: input, shape index: {}]
  %s2 = inlined_call_operand.vmem [shape: bf16[1,256], index: 2, kind: input, shape index: {}]
  %s3 = inlined_call_operand.hbm [shape: bf16[16,256], index: 3, kind: output, shape index: {}]
  %s4 = sld [smem:[#allocation0]]
  $region30: #{on_demand_linear.1} parent=0
    _
  %s6 = ssub.s32 1, %s4
  %s7 = scalar_select 0, %s6, %s4
  $region1: #{on_demand_linear.1} parent=0
    #allocation3 [shape = 'u8[8192]{0}', space=vmem, size = 0x2000, scoped, tag = 'output window, operand 0, single buffered']
    #allocation4 [shape = 's32[1]{0}', space=sflag, size = 0x4, scoped, tag = 'scoped memory for on_demand_linear.1']
    %8 = vsyncpa [#allocation4], 0
    // Predicated region
    $region2: #{on_demand_linear.1} parent=1 // pred_check
      _
    $region3: #{on_demand_linear.1} parent=1 // pred_check_branch
      %10 = sbr.rel (0) target = $region5
    $region4: #{on_demand_linear.1} parent=1 // pred_region
      _
    $region5: #{on_demand_linear.1} parent=1 // pred_fallthru
      _
    // Predicated region
    $region6: #{on_demand_linear.1} parent=1 // pred_check
      _
    $region7: #{on_demand_linear.1} parent=1 // pred_check_branch
      %12 = sbr.rel (0) target = $region9
    $region8: #{on_demand_linear.1} parent=1 // pred_region
      _
    $region9: #{on_demand_linear.1} parent=1 // pred_fallthru
      _
    // Predicated region
    $region10: #{on_demand_linear.1} parent=1 // pred_check
      _
    $region11: #{on_demand_linear.1} parent=1 // pred_check_branch
      %14 = sbr.rel (0) target = $region13
    $region12: #{on_demand_linear.1} parent=1 // pred_region
      _
    $region13: #{on_demand_linear.1} parent=1 // pred_fallthru
      _
    %p16 = scmp.eq.s32.totalorder 0, 0
    // Predicated region
    $region14: #{on_demand_linear.1} parent=1 // pred_check
      %p17 = pneg %p16
    $region15: #{on_demand_linear.1} parent=1 // pred_check_branch
      %19 = sbr.rel (%p17) target = $region17
    $region16: #{on_demand_linear.1} parent=1 // pred_region
      %20 = vst [vmem:[#allocation2] sm:$0xff] 0.0
      %21 = vst [vmem:[#allocation2 + $0x8] sm:$0xff] 0.0
      %22 = vst [vmem:[#allocation2 + $0x10] sm:$0xff] 0.0
      %23 = vst [vmem:[#allocation2 + $0x18] sm:$0xff] 0.0
    $region17: #{on_demand_linear.1} parent=1 // pred_fallthru
      _
    %v24 = vld [vmem:[#allocation2] sm:$0xff]
    %v25 = vld [vmem:[#allocation2 + $0x8] sm:$0xff]
    %v26 = vld [vmem:[#allocation2 + $0x10] sm:$0xff]
    %v27 = vld [vmem:[#allocation2 + $0x18] sm:$0xff]
    %v28 = vld [vmem:[%s0] sm:$0xf]
    %v29 = vld [vmem:[%s0 + $0x4] sm:$0xf]
    %v30 = vld [vmem:[%s1] sm:$0xff]
    %v31 = vld [vmem:[%s1 + $0x8] sm:$0xff]
    %v32 = vld [vmem:[%s1 + $0x10] sm:$0xff]
    %v33 = vld [vmem:[%s1 + $0x18] sm:$0xff]
    %v34 = vld [vmem:[%s1 + $0x20] sm:$0xff]
    %v35 = vld [vmem:[%s1 + $0x28] sm:$0xff]
    %v36 = vld [vmem:[%s1 + $0x30] sm:$0xff]
    %v37 = vld [vmem:[%s1 + $0x38] sm:$0xff]
    %v38 = vld [vmem:[%s1 + $0x40] sm:$0xff]
    %v39 = vld [vmem:[%s1 + $0x48] sm:$0xff]
    %v40 = vld [vmem:[%s1 + $0x50] sm:$0xff]
    %v41 = vld [vmem:[%s1 + $0x58] sm:$0xff]
    %v42 = vld [vmem:[%s1 + $0x60] sm:$0xff]
    %v43 = vld [vmem:[%s1 + $0x68] sm:$0xff]
    %v44 = vld [vmem:[%s1 + $0x70] sm:$0xff]
    %v45 = vld [vmem:[%s1 + $0x78] sm:$0xff]
    %v48 = vunpack.c.l.b16 %v28
    %v49 = vunpack.c.l.b16 %v29
    %v50 = vpack.c.b16 %v49, %v48
    %v68 = vunpack.c.l.b16 %v30
    %v69 = vunpack.c.h.b16 %v30
    %v70 = vunpack.c.l.b16 %v31
    %v71 = vunpack.c.h.b16 %v31
    %v72 = vunpack.c.l.b16 %v32
    %v73 = vunpack.c.h.b16 %v32
    %v74 = vunpack.c.l.b16 %v33
    %v75 = vunpack.c.h.b16 %v33
    %v76 = vunpack.c.l.b16 %v34
    %v77 = vunpack.c.h.b16 %v34
    %v78 = vunpack.c.l.b16 %v35
    %v79 = vunpack.c.h.b16 %v35
    %v80 = vunpack.c.l.b16 %v36
    %v81 = vunpack.c.h.b16 %v36
    %v82 = vunpack.c.l.b16 %v37
    %v83 = vunpack.c.h.b16 %v37
    %v84 = vunpack.c.l.b16 %v38
    %v85 = vunpack.c.h.b16 %v38
    %v86 = vunpack.c.l.b16 %v39
    %v87 = vunpack.c.h.b16 %v39
    %v88 = vunpack.c.l.b16 %v40
    %v89 = vunpack.c.h.b16 %v40
    %v90 = vunpack.c.l.b16 %v41
    %v91 = vunpack.c.h.b16 %v41
    %v92 = vunpack.c.l.b16 %v42
    %v93 = vunpack.c.h.b16 %v42
    %v94 = vunpack.c.l.b16 %v43
    %v95 = vunpack.c.h.b16 %v43
    %v96 = vunpack.c.l.b16 %v44
    %v97 = vunpack.c.h.b16 %v44
    %v98 = vunpack.c.l.b16 %v45
    %v99 = vunpack.c.h.b16 %v45
    %v100 = vpack.c.b16 %v70, %v68
    %v101 = vpack.c.b16 %v71, %v69
    %v102 = vpack.c.b16 %v74, %v72
    %v103 = vpack.c.b16 %v75, %v73
    %v104 = vpack.c.b16 %v78, %v76
    %v105 = vpack.c.b16 %v79, %v77
    %v106 = vpack.c.b16 %v82, %v80
    %v107 = vpack.c.b16 %v83, %v81
    %v108 = vpack.c.b16 %v86, %v84
    %v109 = vpack.c.b16 %v87, %v85
    %v110 = vpack.c.b16 %v90, %v88
    %v111 = vpack.c.b16 %v91, %v89
    %v112 = vpack.c.b16 %v94, %v92
    %v113 = vpack.c.b16 %v95, %v93
    %v114 = vpack.c.b16 %v98, %v96
    %v115 = vpack.c.b16 %v99, %v97
    %132 = vmatprep.subr.bf16.mxu0 %v101
    %133 = vmatpush1.bf16.msra.mxu0 %v100
    %134 = vmatprep.subr.bf16.mxu0 %v103
    %135 = vmatpush1.bf16.msra.mxu0 %v102
    %136 = vmatprep.subr.bf16.mxu0 %v105
    %137 = vmatpush1.bf16.msra.mxu0 %v104
    %138 = vmatprep.subr.bf16.mxu0 %v107
    %139 = vmatpush1.bf16.msra.mxu0 %v106
    %140 = vmatprep.subr.bf16.mxu0 %v109
    %141 = vmatpush1.bf16.msra.mxu0 %v108
    %142 = vmatprep.subr.bf16.mxu0 %v111
    %143 = vmatpush1.bf16.msra.mxu0 %v110
    %144 = vmatprep.subr.bf16.mxu0 %v113
    %145 = vmatpush1.bf16.msra.mxu0 %v112
    %146 = vmatprep.subr.bf16.mxu0 %v115
    %147 = vmatpush1.bf16.msra.mxu0 %v114
    %148 = vmatprep.subr.bf16.mxu0 0
    %149 = vmatpush1.bf16.msra.mxu0 0
    %150 = vmatprep.subr.bf16.mxu0 0
    %151 = vmatpush1.bf16.msra.mxu0 0
    %152 = vmatprep.subr.bf16.mxu0 0
    %153 = vmatpush1.bf16.msra.mxu0 0
    %154 = vmatprep.subr.bf16.mxu0 0
    %155 = vmatpush1.bf16.msra.mxu0 0
    %156 = vmatprep.subr.bf16.mxu0 0
    %157 = vmatpush1.bf16.msra.mxu0 0
    %158 = vmatprep.subr.bf16.mxu0 0
    %159 = vmatpush1.bf16.msra.mxu0 0
    %160 = vmatprep.subr.bf16.mxu0 0
    %161 = vmatpush1.bf16.msra.mxu0 0
    %162 = vmatprep.subr.bf16.mxu0 0
    %163 = vmatpush1.bf16.msra.mxu0 0
    %164 = vmatprep.mubr.bf16.mxu0 0
    %165 = vmatmul.mubr.bf16.gmra.mrb[0].mxu0 %v50
    %v166 = vpop.f32.mrb[0].mxu0
    %v167 = vadd.f32 0.0, %v166
    %v168 = vpop.f32.mrb[0].mxu0
    %v169 = vadd.f32 0.0, %v168
    %v170 = vpop.f32.mrb[0].mxu0
    %v171 = vadd.f32 0.0, %v170
    %v172 = vpop.f32.mrb[0].mxu0
    %v173 = vadd.f32 0.0, %v172
    %174 = vdwg.mxu0
    %v175 = vadd.f32 %v24, %v167
    %v176 = vadd.f32 %v25, %v169
    %v177 = vadd.f32 %v26, %v171
    %v178 = vadd.f32 %v27, %v173
    %179 = vst [vmem:[#allocation2] sm:$0xff] %v175
    %180 = vst [vmem:[#allocation2 + $0x8] sm:$0xff] %v176
    %181 = vst [vmem:[#allocation2 + $0x10] sm:$0xff] %v177
    %182 = vst [vmem:[#allocation2 + $0x18] sm:$0xff] %v178
    // Predicated region
    $region18: #{on_demand_linear.1} parent=1 // pred_check
      %p183 = pneg %p16
    $region19: #{on_demand_linear.1} parent=1 // pred_check_branch
      %185 = sbr.rel (%p183) target = $region21
    $region20: #{on_demand_linear.1} parent=1 // pred_region
      %v186 = vld [vmem:[#allocation2] sm:$0xff]
      %v187 = vld [vmem:[#allocation2 + $0x8] sm:$0xff]
      %v188 = vld [vmem:[#allocation2 + $0x10] sm:$0xff]
      %v189 = vld [vmem:[#allocation2 + $0x18] sm:$0xff]
      %v190 = vld [vmem:[%s2] sm:$0x3]
      %v191 = vunpack.c.l.bf16 %v190
      %v193 = vlaneseq
      %v194 = vshrl.u32 %v193, 7
      %v195 = vsub.s32 0, %v194
      %v196 = vrot.slane %v191, %v195
      %v197 = vlaneseq
      %v198 = vshrl.u32 %v197, 7
      %v199 = vsub.s32 2, %v198
      %v200 = vrot.slane %v191, %v199
      %v203 = vlaneseq
      %v204 = vshrl.u32 %v203, 7
      %v205 = vsub.s32 0, %v204
      %v206 = vrot.slane %v196, %v205
      %v207 = vlaneseq
      %v208 = vshrl.u32 %v207, 7
      %v209 = vsub.s32 0, %v208
      %v210 = vrot.slane %v200, %v209
      %v211 = vadd.f32 %v186, %v206
      %v212 = vadd.f32 %v187, %v210
      %v213 = vadd.f32 %v188, %v206
      %v214 = vadd.f32 %v189, %v210
      %v215 = vpack.c.bf16 %v213, %v211
      %v216 = vpack.c.bf16 %v214, %v212
      %v219 = vunpack.c.l.b16 %v215
      %v220 = vunpack.c.l.b16 %v216
      %v221 = vunpack.c.h.b16 %v215
      %v222 = vunpack.c.h.b16 %v216
      %v223 = vpack.c.b16 %v220, %v219
      %v224 = vpack.c.b16 %v222, %v221
      %227 = vst [vmem:[#allocation3] sm:$0xff] %v223
      %228 = vst [vmem:[#allocation3 + $0x8] sm:$0xff] %v224
    $region21: #{on_demand_linear.1} parent=1 // pred_fallthru
      _
    // Predicated region
    $region22: #{on_demand_linear.1} parent=1 // pred_check
      _
    $region23: #{on_demand_linear.1} parent=1 // pred_check_branch
      %230 = sbr.rel (0) target = $region25
    $region24: #{on_demand_linear.1} parent=1 // pred_region
      %s232 = ssub.s32 256, 256
      %233 = vsyncadd [#allocation4], %s232
      %s234 = sshll.u32 [#allocation3], 4
      %s235 = int_to_ptr.vmem [resolvable:$true] %s234
      %240 = dma.vmem_to_hbm [thread:$0]  %s235, 256, %s3, [#allocation4], 128, 128, 8
    $region25: #{on_demand_linear.1} parent=1 // pred_fallthru
      _
    // Predicated region
    $region26: #{on_demand_linear.1} parent=1 // pred_check
      _
    $region27: #{on_demand_linear.1} parent=1 // pred_check_branch
      %242 = sbr.rel (0) target = $region29
    $region28: #{on_demand_linear.1} parent=1 // pred_region
      %243 = dma.done [#allocation4], 256
    $region29: #{on_demand_linear.1} parent=1 // pred_fallthru
      _
    %244 = vsyncpa [#allocation4], 1

</llo_original>
